<compile_context>
chip_gen: v6e
topology: v6e:2x2x1
jax: 0.10.0
libtpu: 0.0.40
codegen_flags: <defaults>
</compile_context>

<pallas_src>
import functools

import jax
import jax.numpy as jnp
from jax.experimental import pallas as pl
from jax.experimental.pallas import tpu as pltpu


def _breg_margin_kernel(nca_ref, ncb_ref, a_ref, b_ref, out_ref, *, margin):
    B, D = a_ref.shape
    N = 2 * B

    a = a_ref[...].astype(jnp.float32)                    # (B, D)
    b = b_ref[...].astype(jnp.float32)                    # (B, D)

    col = jax.lax.broadcasted_iota(jnp.int32, (B, D), 1)  # (B, D)

    # Per-half row max + first-occurrence argmax (== torch.max(dim=1)).
    ma = jnp.max(a, axis=1, keepdims=True)                # (B, 1)
    mb = jnp.max(b, axis=1, keepdims=True)                # (B, 1)
    ia = jnp.min(jnp.where(a == ma, col, D), axis=1, keepdims=True)  # (B, 1)
    ib = jnp.min(jnp.where(b == mb, col, D), axis=1, keepdims=True)  # (B, 1)

    # One-hot argmax masks: computed once, reused below.
    oh_a = col == ia                                      # (B, D) bool
    oh_b = col == ib

    # num_max = histogram of argmax indices over all 2B rows.
    num_max = (jnp.sum(oh_a.astype(jnp.float32), axis=0, keepdims=True)
               + jnp.sum(oh_b.astype(jnp.float32), axis=0, keepdims=True))  # (1, D)

    # positives: dist[i, partner(i)]
    #   pos_ab[i] = ma[i] - a[i, ib[i]],  pos_ba[i] = mb[i] - b[i, ia[i]]
    g_ab = jnp.sum(jnp.where(oh_b, a, 0.0), axis=1, keepdims=True)
    g_ba = jnp.sum(jnp.where(oh_a, b, 0.0), axis=1, keepdims=True)
    pos_sum = (jnp.sum(ma) - jnp.sum(g_ab)) + (jnp.sum(mb) - jnp.sum(g_ba))

    # All-row argmax indices as one lane-dense (1, N) row: two tiny (B,1)
    # transposes + a lane concat.  No (N,D) scratch, no (N,N) diagonal pass.
    idx_row = jnp.concatenate(
        [jnp.transpose(ia.astype(jnp.float32)),
         jnp.transpose(ib.astype(jnp.float32))], axis=1)  # (1, N)

    # idx_perm[i] = idx[negc[i]]: D-free (B,N) one-hot select/sum per half.
    # Exact: integer values carried in f32 (< 2^24), no MXU / no bf16.
    nca = nca_ref[...]                                    # (B, 1) int32
    ncb = ncb_ref[...]                                    # (B, 1) int32
    cn = jax.lax.broadcasted_iota(jnp.int32, (B, N), 1)   # (B, N)
    ipa = jnp.sum(jnp.where(cn == nca, idx_row, 0.0), axis=1,
                  keepdims=True).astype(jnp.int32)        # (B, 1)
    ipb = jnp.sum(jnp.where(cn == ncb, idx_row, 0.0), axis=1,
                  keepdims=True).astype(jnp.int32)        # (B, 1)

    # neg[i] = max_f[i] - f[i, idx_perm[i]]  (exact one-hot gather per half).
    g_na = jnp.sum(jnp.where(col == ipa, a, 0.0), axis=1, keepdims=True)
    g_nb = jnp.sum(jnp.where(col == ipb, b, 0.0), axis=1, keepdims=True)
    ha = jnp.maximum(margin - (ma - g_na), 0.0)
    hb = jnp.maximum(margin - (mb - g_nb), 0.0)
    loss = 0.5 * (pos_sum + jnp.sum(ha * ha) + jnp.sum(hb * hb))

    # Single packed (2, D) store: row 0 = num_max, row 1 = loss (broadcast).
    out_ref[...] = jnp.concatenate(
        [num_max, jnp.zeros_like(num_max) + loss], axis=0)


def _negative_columns(key, batch_size):
    """One random negative column per row, uniform over the N-2 mask-allowed
    columns (skips the diagonal and the positive partner).

    Mirrors `torch.randint(0, len(row), (1,))` on the masked dist_matrix row:
    same distribution, not torch's bit stream."""
    N = 2 * batch_size
    r = jax.random.randint(key, (N,), 0, N - 2, dtype=jnp.int32)
    rows = jnp.arange(N, dtype=jnp.int32)
    partner = jnp.where(rows < batch_size, rows + batch_size, rows - batch_size)
    e1 = jnp.minimum(rows, partner)
    e2 = jnp.maximum(rows, partner)
    c = r + (r >= e1).astype(jnp.int32)        # skip the first masked column
    return c + (c >= e2).astype(jnp.int32)     # skip the second; in [0, N)


def breg_margin_loss(out_a, out_b, key, margin=1.0, beta=0.5):
    """JAX/Pallas equivalent of BregMarginLoss.forward. Returns (loss, num_max)."""
    del beta  # unused in the reference forward pass
    B, D = out_a.shape
    assert out_b.shape == (B, D)
    N = 2 * B
    assert N >= 3, "need at least one mask-allowed negative per row"

    negc = _negative_columns(key, B)                        # (N,)
    negc_a = negc[:B].reshape(B, 1).astype(jnp.int32)       # columns for rows < B
    negc_b = negc[B:].reshape(B, 1).astype(jnp.int32)       # columns for rows >= B

    # Whole-array VMEM requirement (inputs + f32 copies + (B,D)/(B,N) temps),
    # with generous headroom; grid-less call -> no double buffering.
    vmem_bytes = int(min(4 * (10 * B * D + 6 * B * N) + (4 << 20), 64 << 20))

    out = pl.pallas_call(
        functools.partial(_breg_margin_kernel, margin=float(margin)),
        out_shape=jax.ShapeDtypeStruct((2, D), jnp.float32),
        # No grid / no in_specs: every operand is a whole-array, single-buffered
        # VMEM block (exactly one DMA in, one DMA out).
        compiler_params=pltpu.CompilerParams(vmem_limit_bytes=vmem_bytes),
    )(negc_a, negc_b, out_a, out_b)

    # TODO(synk): for very large B*D add a feature-axis grid with running
    # max/argmax/num_max carries, and split the row axis into "parallel"
    # blocks (per-block partials) to use both TensorCores on v7x.
    return out[1, 0], out[0]


if __name__ == "__main__":
    batch_size = 4          # N = 2*batch_size = 8 rows
    feat_dim = 128          # lane-dense feature dim
    margin = 1.0

    key = jax.random.PRNGKey(0)
    ka, kb, kneg = jax.random.split(key, 3)
    out_a = jax.random.normal(ka, (batch_size, feat_dim), dtype=jnp.float32)
    out_b = jax.random.normal(kb, (batch_size, feat_dim), dtype=jnp.float32)

    loss, num_max = breg_margin_loss(out_a, out_b, kneg, margin=margin)
    loss = jax.block_until_ready(loss)
    num_max = jax.block_until_ready(num_max)

    # ---- pure-JAX reference (same wrapper-side negative draw -> exact) -----
    B, D = batch_size, feat_dim
    N = 2 * B
    feats = jnp.concatenate([out_a, out_b], axis=0)
    max_f = jnp.max(feats, axis=1)
    idx = jnp.argmax(feats, axis=1)
    num_max_ref = jnp.sum(jax.nn.one_hot(idx, D, dtype=jnp.float32), axis=0)

    dist = max_f[:, None] - feats[:, idx]                  # (N, N)
    rows = jnp.arange(N)
    partner = (rows + B) % N
    pos_sum = jnp.sum(dist[rows, partner])
    negc_ref = _negative_columns(kneg, B)
    neg = dist[rows, negc_ref]
    hinge = jnp.maximum(margin - neg, 0.0)
    loss_ref = 0.5 * (pos_sum + jnp.sum(hinge * hinge))

    assert jnp.allclose(num_max, num_max_ref), (num_max, num_max_ref)
    assert jnp.allclose(loss, loss_ref, rtol=1e-5, atol=1e-5), \
        (float(loss), float(loss_ref))

    print("KERNEL_OK")
</pallas_src>

<mosaic_0001>
module attributes {stable_mosaic.version = 11 : i64} {
  func.func @_breg_margin_kernel(%arg0: memref<4x1xi32, #tpu.memory_space<vmem>>, %arg1: memref<4x1xi32, #tpu.memory_space<vmem>>, %arg2: memref<4x128xf32, #tpu.memory_space<vmem>>, %arg3: memref<4x128xf32, #tpu.memory_space<vmem>>, %arg4: memref<2x128xf32, #tpu.memory_space<vmem>>) attributes {dimension_semantics = [], scalar_prefetch = 0 : i64, scratch_operands = 0 : i64, tpu.core_type = #tpu.core_type<tc>} {
    %c0 = arith.constant 0 : index
    %c0_0 = arith.constant 0 : index
    %0 = vector.load %arg2[%c0, %c0_0] : memref<4x128xf32, #tpu.memory_space<vmem>>, vector<4x128xf32>
    %c0_1 = arith.constant 0 : index
    %c0_2 = arith.constant 0 : index
    %1 = vector.load %arg3[%c0_1, %c0_2] : memref<4x128xf32, #tpu.memory_space<vmem>>, vector<4x128xf32>
    %2 = tpu.iota {dimensions = array<i32: 1>} : vector<4x128xi32>
    %cst = arith.constant dense<0xFF800000> : vector<4xf32>
    %3 = vector.multi_reduction <maximumf>, %0, %cst [1] : vector<4x128xf32> to vector<4xf32>
    %4 = vector.shape_cast %3 : vector<4xf32> to vector<4x1xf32>
    %cst_3 = arith.constant dense<0xFF800000> : vector<4xf32>
    %5 = vector.multi_reduction <maximumf>, %1, %cst_3 [1] : vector<4x128xf32> to vector<4xf32>
    %6 = vector.shape_cast %5 : vector<4xf32> to vector<4x1xf32>
    %7 = vector.broadcast %4 : vector<4x1xf32> to vector<4x128xf32>
    %8 = arith.cmpf oeq, %0, %7 : vector<4x128xf32>
    %c128_i32 = arith.constant 128 : i32
    %9 = vector.broadcast %c128_i32 : i32 to vector<4x128xi32>
    %10 = arith.select %8, %2, %9 : vector<4x128xi1>, vector<4x128xi32>
    %cst_4 = arith.constant dense<2147483647> : vector<4xi32>
    %11 = vector.multi_reduction <minsi>, %10, %cst_4 [1] : vector<4x128xi32> to vector<4xi32>
    %12 = vector.shape_cast %11 : vector<4xi32> to vector<4x1xi32>
    %13 = vector.broadcast %6 : vector<4x1xf32> to vector<4x128xf32>
    %14 = arith.cmpf oeq, %1, %13 : vector<4x128xf32>
    %c128_i32_5 = arith.constant 128 : i32
    %15 = vector.broadcast %c128_i32_5 : i32 to vector<4x128xi32>
    %16 = arith.select %14, %2, %15 : vector<4x128xi1>, vector<4x128xi32>
    %cst_6 = arith.constant dense<2147483647> : vector<4xi32>
    %17 = vector.multi_reduction <minsi>, %16, %cst_6 [1] : vector<4x128xi32> to vector<4xi32>
    %18 = vector.shape_cast %17 : vector<4xi32> to vector<4x1xi32>
    %19 = vector.broadcast %12 : vector<4x1xi32> to vector<4x128xi32>
    %20 = arith.cmpi eq, %2, %19 : vector<4x128xi32>
    %21 = vector.broadcast %18 : vector<4x1xi32> to vector<4x128xi32>
    %22 = arith.cmpi eq, %2, %21 : vector<4x128xi32>
    %23 = arith.extui %20 : vector<4x128xi1> to vector<4x128xi32>
    %24 = arith.sitofp %23 : vector<4x128xi32> to vector<4x128xf32>
    %cst_7 = arith.constant dense<0.000000e+00> : vector<128xf32>
    %25 = vector.multi_reduction <add>, %24, %cst_7 [0] : vector<4x128xf32> to vector<128xf32>
    %26 = vector.shape_cast %25 : vector<128xf32> to vector<1x128xf32>
    %27 = arith.extui %22 : vector<4x128xi1> to vector<4x128xi32>
    %28 = arith.sitofp %27 : vector<4x128xi32> to vector<4x128xf32>
    %cst_8 = arith.constant dense<0.000000e+00> : vector<128xf32>
    %29 = vector.multi_reduction <add>, %28, %cst_8 [0] : vector<4x128xf32> to vector<128xf32>
    %30 = vector.shape_cast %29 : vector<128xf32> to vector<1x128xf32>
    %31 = arith.addf %26, %30 : vector<1x128xf32>
    %cst_9 = arith.constant 0.000000e+00 : f32
    %32 = vector.broadcast %cst_9 : f32 to vector<4x128xf32>
    %33 = arith.select %22, %0, %32 : vector<4x128xi1>, vector<4x128xf32>
    %cst_10 = arith.constant dense<0.000000e+00> : vector<4xf32>
    %34 = vector.multi_reduction <add>, %33, %cst_10 [1] : vector<4x128xf32> to vector<4xf32>
    %35 = vector.shape_cast %34 : vector<4xf32> to vector<4x1xf32>
    %cst_11 = arith.constant 0.000000e+00 : f32
    %36 = vector.broadcast %cst_11 : f32 to vector<4x128xf32>
    %37 = arith.select %20, %1, %36 : vector<4x128xi1>, vector<4x128xf32>
    %cst_12 = arith.constant dense<0.000000e+00> : vector<4xf32>
    %38 = vector.multi_reduction <add>, %37, %cst_12 [1] : vector<4x128xf32> to vector<4xf32>
    %39 = vector.shape_cast %38 : vector<4xf32> to vector<4x1xf32>
    %40 = vector.shape_cast %4 : vector<4x1xf32> to vector<1x4x1xf32>
    %cst_13 = arith.constant dense<0.000000e+00> : vector<1xf32>
    %41 = vector.multi_reduction <add>, %40, %cst_13 [1, 2] : vector<1x4x1xf32> to vector<1xf32>
    %42 = vector.shape_cast %41 : vector<1xf32> to vector<1x1x1xf32>
    %43 = vector.extract %42[0, 0, 0] : f32 from vector<1x1x1xf32>
    %44 = vector.shape_cast %35 : vector<4x1xf32> to vector<1x4x1xf32>
    %cst_14 = arith.constant dense<0.000000e+00> : vector<1xf32>
    %45 = vector.multi_reduction <add>, %44, %cst_14 [1, 2] : vector<1x4x1xf32> to vector<1xf32>
    %46 = vector.shape_cast %45 : vector<1xf32> to vector<1x1x1xf32>
    %47 = vector.extract %46[0, 0, 0] : f32 from vector<1x1x1xf32>
    %48 = arith.subf %43, %47 : f32
    %49 = vector.shape_cast %6 : vector<4x1xf32> to vector<1x4x1xf32>
    %cst_15 = arith.constant dense<0.000000e+00> : vector<1xf32>
    %50 = vector.multi_reduction <add>, %49, %cst_15 [1, 2] : vector<1x4x1xf32> to vector<1xf32>
    %51 = vector.shape_cast %50 : vector<1xf32> to vector<1x1x1xf32>
    %52 = vector.extract %51[0, 0, 0] : f32 from vector<1x1x1xf32>
    %53 = vector.shape_cast %39 : vector<4x1xf32> to vector<1x4x1xf32>
    %cst_16 = arith.constant dense<0.000000e+00> : vector<1xf32>
    %54 = vector.multi_reduction <add>, %53, %cst_16 [1, 2] : vector<1x4x1xf32> to vector<1xf32>
    %55 = vector.shape_cast %54 : vector<1xf32> to vector<1x1x1xf32>
    %56 = vector.extract %55[0, 0, 0] : f32 from vector<1x1x1xf32>
    %57 = arith.subf %52, %56 : f32
    %58 = arith.addf %48, %57 : f32
    %59 = arith.sitofp %12 : vector<4x1xi32> to vector<4x1xf32>
    %60 = tpu.transpose %59, [1, 0] : vector<4x1xf32> -> vector<1x4xf32>
    %61 = arith.sitofp %18 : vector<4x1xi32> to vector<4x1xf32>
    %62 = tpu.transpose %61, [1, 0] : vector<4x1xf32> -> vector<1x4xf32>
    %63 = tpu.concatenate %60, %62 in 1 : vector<1x4xf32>, vector<1x4xf32> -> vector<1x8xf32>
    %c0_17 = arith.constant 0 : index
    %c0_18 = arith.constant 0 : index
    %64 = vector.load %arg0[%c0_17, %c0_18] : memref<4x1xi32, #tpu.memory_space<vmem>>, vector<4x1xi32>
    %c0_19 = arith.constant 0 : index
    %c0_20 = arith.constant 0 : index
    %65 = vector.load %arg1[%c0_19, %c0_20] : memref<4x1xi32, #tpu.memory_space<vmem>>, vector<4x1xi32>
    %66 = tpu.iota {dimensions = array<i32: 1>} : vector<4x8xi32>
    %67 = vector.broadcast %64 : vector<4x1xi32> to vector<4x8xi32>
    %68 = arith.cmpi eq, %66, %67 : vector<4x8xi32>
    %cst_21 = arith.constant 0.000000e+00 : f32
    %69 = vector.shape_cast %63 : vector<1x8xf32> to vector<1x8xf32>
    %70 = vector.broadcast %69 : vector<1x8xf32> to vector<4x8xf32>
    %71 = vector.broadcast %cst_21 : f32 to vector<4x8xf32>
    %72 = arith.select %68, %70, %71 : vector<4x8xi1>, vector<4x8xf32>
    %cst_22 = arith.constant dense<0.000000e+00> : vector<4xf32>
    %73 = vector.multi_reduction <add>, %72, %cst_22 [1] : vector<4x8xf32> to vector<4xf32>
    %74 = vector.shape_cast %73 : vector<4xf32> to vector<4x1xf32>
    %75 = arith.fptosi %74 : vector<4x1xf32> to vector<4x1xi32>
    %76 = vector.broadcast %65 : vector<4x1xi32> to vector<4x8xi32>
    %77 = arith.cmpi eq, %66, %76 : vector<4x8xi32>
    %cst_23 = arith.constant 0.000000e+00 : f32
    %78 = vector.shape_cast %63 : vector<1x8xf32> to vector<1x8xf32>
    %79 = vector.broadcast %78 : vector<1x8xf32> to vector<4x8xf32>
    %80 = vector.broadcast %cst_23 : f32 to vector<4x8xf32>
    %81 = arith.select %77, %79, %80 : vector<4x8xi1>, vector<4x8xf32>
    %cst_24 = arith.constant dense<0.000000e+00> : vector<4xf32>
    %82 = vector.multi_reduction <add>, %81, %cst_24 [1] : vector<4x8xf32> to vector<4xf32>
    %83 = vector.shape_cast %82 : vector<4xf32> to vector<4x1xf32>
    %84 = arith.fptosi %83 : vector<4x1xf32> to vector<4x1xi32>
    %85 = vector.broadcast %75 : vector<4x1xi32> to vector<4x128xi32>
    %86 = arith.cmpi eq, %2, %85 : vector<4x128xi32>
    %cst_25 = arith.constant 0.000000e+00 : f32
    %87 = vector.broadcast %cst_25 : f32 to vector<4x128xf32>
    %88 = arith.select %86, %0, %87 : vector<4x128xi1>, vector<4x128xf32>
    %cst_26 = arith.constant dense<0.000000e+00> : vector<4xf32>
    %89 = vector.multi_reduction <add>, %88, %cst_26 [1] : vector<4x128xf32> to vector<4xf32>
    %90 = vector.shape_cast %89 : vector<4xf32> to vector<4x1xf32>
    %91 = vector.broadcast %84 : vector<4x1xi32> to vector<4x128xi32>
    %92 = arith.cmpi eq, %2, %91 : vector<4x128xi32>
    %cst_27 = arith.constant 0.000000e+00 : f32
    %93 = vector.broadcast %cst_27 : f32 to vector<4x128xf32>
    %94 = arith.select %92, %1, %93 : vector<4x128xi1>, vector<4x128xf32>
    %cst_28 = arith.constant dense<0.000000e+00> : vector<4xf32>
    %95 = vector.multi_reduction <add>, %94, %cst_28 [1] : vector<4x128xf32> to vector<4xf32>
    %96 = vector.shape_cast %95 : vector<4xf32> to vector<4x1xf32>
    %97 = arith.subf %4, %90 : vector<4x1xf32>
    %cst_29 = arith.constant 1.000000e+00 : f32
    %98 = vector.broadcast %cst_29 : f32 to vector<4x1xf32>
    %99 = arith.subf %98, %97 : vector<4x1xf32>
    %cst_30 = arith.constant 0.000000e+00 : f32
    %100 = vector.broadcast %cst_30 : f32 to vector<4x1xf32>
    %101 = arith.maximumf %99, %100 : vector<4x1xf32>
    %102 = arith.subf %6, %96 : vector<4x1xf32>
    %cst_31 = arith.constant 1.000000e+00 : f32
    %103 = vector.broadcast %cst_31 : f32 to vector<4x1xf32>
    %104 = arith.subf %103, %102 : vector<4x1xf32>
    %cst_32 = arith.constant 0.000000e+00 : f32
    %105 = vector.broadcast %cst_32 : f32 to vector<4x1xf32>
    %106 = arith.maximumf %104, %105 : vector<4x1xf32>
    %107 = arith.mulf %101, %101 : vector<4x1xf32>
    %108 = vector.shape_cast %107 : vector<4x1xf32> to vector<1x4x1xf32>
    %cst_33 = arith.constant dense<0.000000e+00> : vector<1xf32>
    %109 = vector.multi_reduction <add>, %108, %cst_33 [1, 2] : vector<1x4x1xf32> to vector<1xf32>
    %110 = vector.shape_cast %109 : vector<1xf32> to vector<1x1x1xf32>
    %111 = vector.extract %110[0, 0, 0] : f32 from vector<1x1x1xf32>
    %112 = arith.addf %58, %111 : f32
    %113 = arith.mulf %106, %106 : vector<4x1xf32>
    %114 = vector.shape_cast %113 : vector<4x1xf32> to vector<1x4x1xf32>
    %cst_34 = arith.constant dense<0.000000e+00> : vector<1xf32>
    %115 = vector.multi_reduction <add>, %114, %cst_34 [1, 2] : vector<1x4x1xf32> to vector<1xf32>
    %116 = vector.shape_cast %115 : vector<1xf32> to vector<1x1x1xf32>
    %117 = vector.extract %116[0, 0, 0] : f32 from vector<1x1x1xf32>
    %118 = arith.addf %112, %117 : f32
    %cst_35 = arith.constant 5.000000e-01 : f32
    %119 = arith.mulf %cst_35, %118 : f32
    %cst_36 = arith.constant 0.000000e+00 : f32
    %120 = vector.broadcast %cst_36 : f32 to vector<1x128xf32>
    %121 = vector.broadcast %119 : f32 to vector<1x128xf32>
    %122 = arith.addf %120, %121 : vector<1x128xf32>
    %123 = tpu.concatenate %31, %122 in 0 : vector<1x128xf32>, vector<1x128xf32> -> vector<2x128xf32>
    %c0_37 = arith.constant 0 : index
    %c0_38 = arith.constant 0 : index
    %124 = vector.load %arg4[%c0_37, %c0_38] : memref<2x128xf32, #tpu.memory_space<vmem>>, vector<2x128xf32>
    tpu.vector_store %arg4[%c0_37, %c0_38], %123 {strides = array<i32>} : memref<2x128xf32, #tpu.memory_space<vmem>>, vector<2x128xf32>,
    return
  }
}

</mosaic_0001>

<llo_original>
// kernel: tpu_custom_call.1
$region0: #{tpu_custom_call.1}
  #allocation0 [shape = 'u32[]', space=smem, size = 0x4, offset = 0x4, fixed_abs, tag = 'smem constant byte address 0x4 - core index']
  #allocation1 [shape = 'u32[144,128]{1,0:T(1,128)}', space=vmem, size = 0x12000, scoped, tag = 'internal scratch']
  %s0 = inlined_call_operand.vmem [shape: s32[4,1], index: 0, kind: input, shape index: {}]
  %s1 = inlined_call_operand.vmem [shape: s32[4,1], index: 1, kind: input, shape index: {}]
  %s2 = inlined_call_operand.vmem [shape: f32[4,128], index: 2, kind: input, shape index: {}]
  %s3 = inlined_call_operand.vmem [shape: f32[4,128], index: 3, kind: input, shape index: {}]
  %s4 = inlined_call_operand.hbm [shape: f32[2,128], index: 4, kind: output, shape index: {}]
  %s5 = sld [smem:[#allocation0]]
  $region26: #{tpu_custom_call.1} parent=0
    _
  %s7 = ssub.s32 1, %s5
  %s8 = scalar_select 0, %s7, %s5
  $region1: #{tpu_custom_call.1} parent=0
    #allocation2 [shape = 'u8[1024]{0}', space=vmem, size = 0x400, scoped, tag = 'output window, operand 0, single buffered']
    #allocation3 [shape = 's32[1]{0}', space=sflag, size = 0x4, scoped, tag = 'scoped memory for tpu_custom_call.1']
    %9 = vsyncpa [#allocation3], 0
    // Predicated region
    $region2: #{tpu_custom_call.1} parent=1 // pred_check
      _
    $region3: #{tpu_custom_call.1} parent=1 // pred_check_branch
      %11 = sbr.rel (0) target = $region5
    $region4: #{tpu_custom_call.1} parent=1 // pred_region
      _
    $region5: #{tpu_custom_call.1} parent=1 // pred_fallthru
      _
    // Predicated region
    $region6: #{tpu_custom_call.1} parent=1 // pred_check
      _
    $region7: #{tpu_custom_call.1} parent=1 // pred_check_branch
      %13 = sbr.rel (0) target = $region9
    $region8: #{tpu_custom_call.1} parent=1 // pred_region
      _
    $region9: #{tpu_custom_call.1} parent=1 // pred_fallthru
      _
    // Predicated region
    $region10: #{tpu_custom_call.1} parent=1 // pred_check
      _
    $region11: #{tpu_custom_call.1} parent=1 // pred_check_branch
      %15 = sbr.rel (0) target = $region13
    $region12: #{tpu_custom_call.1} parent=1 // pred_region
      _
    $region13: #{tpu_custom_call.1} parent=1 // pred_fallthru
      _
    // Predicated region
    $region14: #{tpu_custom_call.1} parent=1 // pred_check
      _
    $region15: #{tpu_custom_call.1} parent=1 // pred_check_branch
      %17 = sbr.rel (0) target = $region17
    $region16: #{tpu_custom_call.1} parent=1 // pred_region
      _
    $region17: #{tpu_custom_call.1} parent=1 // pred_fallthru
      _
    %v18 = vld [vmem:[%s2] sm:$0xf]
    %v19 = vld [vmem:[%s3] sm:$0xf]
    %v20 = vlaneseq
    %v21 = vand.u32 %v20, 127
    %vm22 = vcmask 1043456
    %v23 = vsel %vm22, %v18, -inf
    %24 = vmax.xlane.f32.xlu0 %v23
    %v25 = vpop.xlane.xlu0 %24
    %v26 = vsel %vm22, %v19, -inf
    %27 = vmax.xlane.f32.xlu0 %v26
    %v28 = vpop.xlane.xlu0 %27
    %vm29 = vcmp.eq.f32.partialorder %v18, %v25
    %v30 = vsel %vm29, %v21, 128
    %v31 = vsel %vm22, %v30, 2147483647
    %v32 = vand.u32 %v31, 65535
    %v33 = vshra.s32 %v31, 16
    %v34 = vcvt.s32.f32 %v32
    %v35 = vcvt.s32.f32 %v33
    %36 = vmin.xlane.f32.xlu0 %v35
    %v37 = vpop.xlane.xlu0 %36
    %vm38 = vcmp.eq.f32.partialorder %v35, %v37
    %v39 = vsel %vm38, %v34, inf
    %40 = vmin.xlane.f32.xlu0 %v39
    %v41 = vpop.xlane.xlu0 %40
    %v42 = vcvt.f32.s32 %v41
    %v43 = vcvt.f32.s32 %v37
    %v44 = vshll.u32 %v43, 16
    %v45 = vadd.s32 %v44, %v42
    %vm46 = vcmp.eq.f32.partialorder %v19, %v28
    %v47 = vsel %vm46, %v21, 128
    %v48 = vsel %vm22, %v47, 2147483647
    %v49 = vand.u32 %v48, 65535
    %v50 = vshra.s32 %v48, 16
    %v51 = vcvt.s32.f32 %v49
    %v52 = vcvt.s32.f32 %v50
    %53 = vmin.xlane.f32.xlu0 %v52
    %v54 = vpop.xlane.xlu0 %53
    %vm55 = vcmp.eq.f32.partialorder %v52, %v54
    %v56 = vsel %vm55, %v51, inf
    %57 = vmin.xlane.f32.xlu0 %v56
    %v58 = vpop.xlane.xlu0 %57
    %v59 = vcvt.f32.s32 %v58
    %v60 = vcvt.f32.s32 %v54
    %v61 = vshll.u32 %v60, 16
    %v62 = vadd.s32 %v61, %v59
    %vm63 = vcmp.eq.s32.totalorder %v21, %v45
    %vm64 = vcmp.eq.s32.totalorder %v21, %v62
    %v65 = vsel %vm63, 1, 0
    %v66 = vcvt.s32.f32 %v65
    %v67 = vsel %vm22, %v66, 0.0
    %v68 = vrot.slane %v67, 4
    %v69 = vadd.f32 %v67, %v68
    %v70 = vrot.slane %v69, 2
    %v71 = vadd.f32 %v69, %v70
    %v72 = vrot.slane %v71, 1
    %v73 = vadd.f32 %v71, %v72
    %v74 = vsel %vm64, 1, 0
    %v75 = vcvt.s32.f32 %v74
    %v76 = vsel %vm22, %v75, 0.0
    %v77 = vrot.slane %v76, 4
    %v78 = vadd.f32 %v76, %v77
    %v79 = vrot.slane %v78, 2
    %v80 = vadd.f32 %v78, %v79
    %v81 = vrot.slane %v80, 1
    %v82 = vadd.f32 %v80, %v81
    %v83 = vadd.f32 %v73, %v82
    %v84 = vsel %vm64, %v18, 0.0
    %v85 = vsel %vm22, %v84, 0.0
    %86 = vadd.xlane.f32.xlu0 %v85
    %v87 = vpop.xlane.xlu0 %86
    %v88 = vsel %vm63, %v19, 0.0
    %v89 = vsel %vm22, %v88, 0.0
    %90 = vadd.xlane.f32.xlu0 %v89
    %v91 = vpop.xlane.xlu0 %90
    %vm92 = vcmask 3072
    %v93 = vsel %vm92, %v25, 0.0
    %94 = vadd.xlane.f32.xlu0 %v93
    %v95 = vpop.xlane.xlu0 %94
    %v96 = vrot.slane %v95, 4
    %v97 = vadd.f32 %v95, %v96
    %v98 = vrot.slane %v97, 2
    %v99 = vadd.f32 %v97, %v98
    %v100 = vrot.slane %v99, 1
    %v101 = vadd.f32 %v99, %v100
    %s102 = vtos %v101
    %v103 = vsel %vm92, %v87, 0.0
    %104 = vadd.xlane.f32.xlu0 %v103
    %v105 = vpop.xlane.xlu0 %104
    %v106 = vrot.slane %v105, 4
    %v107 = vadd.f32 %v105, %v106
    %v108 = vrot.slane %v107, 2
    %v109 = vadd.f32 %v107, %v108
    %v110 = vrot.slane %v109, 1
    %v111 = vadd.f32 %v109, %v110
    %s112 = vtos %v111
    %s113 = ssub.f32 %s102, %s112
    %v114 = vsel %vm92, %v28, 0.0
    %115 = vadd.xlane.f32.xlu0 %v114
    %v116 = vpop.xlane.xlu0 %115
    %v117 = vrot.slane %v116, 4
    %v118 = vadd.f32 %v116, %v117
    %v119 = vrot.slane %v118, 2
    %v120 = vadd.f32 %v118, %v119
    %v121 = vrot.slane %v120, 1
    %v122 = vadd.f32 %v120, %v121
    %s123 = vtos %v122
    %v124 = vsel %vm92, %v91, 0.0
    %125 = vadd.xlane.f32.xlu0 %v124
    %v126 = vpop.xlane.xlu0 %125
    %v127 = vrot.slane %v126, 4
    %v128 = vadd.f32 %v126, %v127
    %v129 = vrot.slane %v128, 2
    %v130 = vadd.f32 %v128, %v129
    %v131 = vrot.slane %v130, 1
    %v132 = vadd.f32 %v130, %v131
    %s133 = vtos %v132
    %s134 = ssub.f32 %s123, %s133
    %s135 = sadd.f32 %s113, %s134
    %v136 = vcvt.s32.f32 %v45
    %137 = vxpose.xlu0.b32.start [1/16] %v136, 128
    %138 = vxpose.xlu0.b32.cont [2/16] 0.0, 128
    %139 = vxpose.xlu0.b32.cont [3/16] 0.0, 128
    %140 = vxpose.xlu0.b32.cont [4/16] 0.0, 128
    %141 = vxpose.xlu0.b32.cont [5/16] 0.0, 128
    %142 = vxpose.xlu0.b32.cont [6/16] 0.0, 128
    %143 = vxpose.xlu0.b32.cont [7/16] 0.0, 128
    %144 = vxpose.xlu0.b32.cont [8/16] 0.0, 128
    %145 = vxpose.xlu0.b32.cont [9/16] 0.0, 128
    %146 = vxpose.xlu0.b32.cont [10/16] 0.0, 128
    %147 = vxpose.xlu0.b32.cont [11/16] 0.0, 128
    %148 = vxpose.xlu0.b32.cont [12/16] 0.0, 128
    %149 = vxpose.xlu0.b32.cont [13/16] 0.0, 128
    %150 = vxpose.xlu0.b32.cont [14/16] 0.0, 128
    %151 = vxpose.xlu0.b32.cont [15/16] 0.0, 128
    %152 = vxpose.xlu0.b32.end [16/16] 0.0, 128
    %v153 = vpop.trf.xlu0
    %v154 = vpop.trf.xlu0
    %v155 = vpop.trf.xlu0
    %v156 = vpop.trf.xlu0
    %v157 = vpop.trf.xlu0
    %v158 = vpop.trf.xlu0
    %v159 = vpop.trf.xlu0
    %v160 = vpop.trf.xlu0
    %v161 = vpop.trf.xlu0
    %v162 = vpop.trf.xlu0
    %v163 = vpop.trf.xlu0
    %v164 = vpop.trf.xlu0
    %v165 = vpop.trf.xlu0
    %v166 = vpop.trf.xlu0
    %v167 = vpop.trf.xlu0
    %v168 = vpop.trf.xlu0
    %v169 = vcvt.s32.f32 %v62
    %170 = vxpose.xlu0.b32.start [1/16] %v169, 128
    %171 = vxpose.xlu0.b32.cont [2/16] 0.0, 128
    %172 = vxpose.xlu0.b32.cont [3/16] 0.0, 128
    %173 = vxpose.xlu0.b32.cont [4/16] 0.0, 128
    %174 = vxpose.xlu0.b32.cont [5/16] 0.0, 128
    %175 = vxpose.xlu0.b32.cont [6/16] 0.0, 128
    %176 = vxpose.xlu0.b32.cont [7/16] 0.0, 128
    %177 = vxpose.xlu0.b32.cont [8/16] 0.0, 128
    %178 = vxpose.xlu0.b32.cont [9/16] 0.0, 128
    %179 = vxpose.xlu0.b32.cont [10/16] 0.0, 128
    %180 = vxpose.xlu0.b32.cont [11/16] 0.0, 128
    %181 = vxpose.xlu0.b32.cont [12/16] 0.0, 128
    %182 = vxpose.xlu0.b32.cont [13/16] 0.0, 128
    %183 = vxpose.xlu0.b32.cont [14/16] 0.0, 128
    %184 = vxpose.xlu0.b32.cont [15/16] 0.0, 128
    %185 = vxpose.xlu0.b32.end [16/16] 0.0, 128
    %v186 = vpop.trf.xlu0
    %v187 = vpop.trf.xlu0
    %v188 = vpop.trf.xlu0
    %v189 = vpop.trf.xlu0
    %v190 = vpop.trf.xlu0
    %v191 = vpop.trf.xlu0
    %v192 = vpop.trf.xlu0
    %v193 = vpop.trf.xlu0
    %v194 = vpop.trf.xlu0
    %v195 = vpop.trf.xlu0
    %v196 = vpop.trf.xlu0
    %v197 = vpop.trf.xlu0
    %v198 = vpop.trf.xlu0
    %v199 = vpop.trf.xlu0
    %v200 = vpop.trf.xlu0
    %v201 = vpop.trf.xlu0
    %203 = vrot.lane.b32.xlu0 %v186, 4
    %v204 = vpop.permute.xlu0 %203
    %vm206 = vcmask 31744
    %v207 = vsel %vm206, %v153, %v204
    %v208 = vld [vmem:[%s0] sm:$0xf]
    %v209 = vld [vmem:[%s1] sm:$0xf]
    %210 = vset.pattern.permute.xlu0 0
    %211 = vperm.xlu0 %210, %v208
    %v212 = vpop.permute.xlu0 %211
    %vm213 = vcmp.eq.s32.totalorder %v21, %v212
    %v214 = vlaneseq
    %v215 = vshrl.u32 %v214, 7
    %v216 = vsub.s32 0, %v215
    %v217 = vrot.slane %v207, %v216
    %v218 = vsel %vm213, %v217, 0.0
    %vm219 = vcmask 60416
    %v220 = vsel %vm219, %v218, 0.0
    %221 = vadd.xlane.f32.xlu0 %v220
    %v222 = vpop.xlane.xlu0 %221
    %v223 = vcvt.f32.s32.to.zero.pseudo %v222
    %224 = vset.pattern.permute.xlu0 0
    %225 = vperm.xlu0 %224, %v209
    %v226 = vpop.permute.xlu0 %225
    %vm227 = vcmp.eq.s32.totalorder %v21, %v226
    %v228 = vsel %vm227, %v217, 0.0
    %v229 = vsel %vm219, %v228, 0.0
    %230 = vadd.xlane.f32.xlu0 %v229
    %v231 = vpop.xlane.xlu0 %230
    %v232 = vcvt.f32.s32.to.zero.pseudo %v231
    %vm233 = vcmp.eq.s32.totalorder %v21, %v223
    %v234 = vsel %vm233, %v18, 0.0
    %v235 = vsel %vm22, %v234, 0.0
    %236 = vadd.xlane.f32.xlu0 %v235
    %v237 = vpop.xlane.xlu0 %236
    %vm238 = vcmp.eq.s32.totalorder %v21, %v232
    %v239 = vsel %vm238, %v19, 0.0
    %v240 = vsel %vm22, %v239, 0.0
    %241 = vadd.xlane.f32.xlu0 %v240
    %v242 = vpop.xlane.xlu0 %241
    %v243 = vsub.f32 %v25, %v237
    %v244 = vsub.f32 1.0, %v243
    %v245 = vmax.f32 %v244, 0.0
    %v246 = vsub.f32 %v28, %v242
    %v247 = vsub.f32 1.0, %v246
    %v248 = vmax.f32 %v247, 0.0
    %v249 = vmul.f32 %v245, %v245
    %v250 = vsel %vm92, %v249, 0.0
    %251 = vadd.xlane.f32.xlu0 %v250
    %v252 = vpop.xlane.xlu0 %251
    %v253 = vrot.slane %v252, 4
    %v254 = vadd.f32 %v252, %v253
    %v255 = vrot.slane %v254, 2
    %v256 = vadd.f32 %v254, %v255
    %v257 = vrot.slane %v256, 1
    %v258 = vadd.f32 %v256, %v257
    %s259 = vtos %v258
    %s260 = sadd.f32 %s135, %s259
    %v261 = vmul.f32 %v248, %v248
    %v262 = vsel %vm92, %v261, 0.0
    %263 = vadd.xlane.f32.xlu0 %v262
    %v264 = vpop.xlane.xlu0 %263
    %v265 = vrot.slane %v264, 4
    %v266 = vadd.f32 %v264, %v265
    %v267 = vrot.slane %v266, 2
    %v268 = vadd.f32 %v266, %v267
    %v269 = vrot.slane %v268, 1
    %v270 = vadd.f32 %v268, %v269
    %s271 = vtos %v270
    %s272 = sadd.f32 %s260, %s271
    %s273 = smul.f32 %s272, 0.5
    %v274 = vstv %s273
    %v275 = vadd.f32 %v274, 0.0
    %vm276 = vcmask 1040384
    %v277 = vsel %vm276, %v83, %v275
    %278 = vst [vmem:[#allocation2] sm:$0x3] %v277
    // Predicated region
    $region18: #{tpu_custom_call.1} parent=1 // pred_check
      _
    $region19: #{tpu_custom_call.1} parent=1 // pred_check_branch
      %280 = sbr.rel (0) target = $region21
    $region20: #{tpu_custom_call.1} parent=1 // pred_region
      %s282 = ssub.s32 32, 32
      %283 = vsyncadd [#allocation3], %s282
      %s285 = sshll.u32 [#allocation2], 4
      %s286 = int_to_ptr.vmem [resolvable:$true] %s285
      %288 = dma.vmem_to_hbm [thread:$0]  %s286, 32, %s4, [#allocation3]
    $region21: #{tpu_custom_call.1} parent=1 // pred_fallthru
      _
    // Predicated region
    $region22: #{tpu_custom_call.1} parent=1 // pred_check
      _
    $region23: #{tpu_custom_call.1} parent=1 // pred_check_branch
      %290 = sbr.rel (0) target = $region25
    $region24: #{tpu_custom_call.1} parent=1 // pred_region
      %291 = dma.done [#allocation3], 32
    $region25: #{tpu_custom_call.1} parent=1 // pred_fallthru
      _
    %292 = vsyncpa [#allocation3], 1

</llo_original>
